<compile_context>
chip_gen: v7x
topology: tpu7x:2x2x1
jax: 0.10.0
libtpu: 0.0.40
codegen_flags: <defaults>
</compile_context>

<pallas_src>
import jax
import jax.numpy as jnp
from jax.experimental import pallas as pl
from jax.experimental.pallas import tpu as pltpu


def _make_kernel(C: int, H: int, W: int):
    # SSIM constants rescaled for box *sums* (9x the mean): the overall 1/81
    # factors cancel between numerator and denominator of the SSIM ratio.
    C1S = 81.0 * (0.01 ** 2)
    C2S = 81.0 * (0.03 ** 2)
    W_SSIM = 0.85 / C          # 0.85 and the channel mean folded together
    W_L1 = 0.15 / C            # 0.15 and the channel mean folded together
    HALF_W_SSIM = 0.5 * W_SSIM  # also folds the SSIM (.)/2 scale

    def kernel(pred_ref, targ_ref, out_ref):
        # pred_ref / targ_ref: (1, 1, H, W) blocks (one batch item, one channel)
        # out_ref:             (1, 1, H, W) f32 block, resident (same block
        #                      index) across the C axis -> used as accumulator.
        c = pl.program_id(1)

        @pl.when(c == 0)
        def _init():
            out_ref[...] = jnp.zeros_like(out_ref)

        # Upcast in VMEM (no-op for f32 inputs; keeps bf16 DMA narrow if used).
        x = pred_ref[0, 0].astype(jnp.float32)   # (H, W)
        y = targ_ref[0, 0].astype(jnp.float32)   # (H, W)

        def reflect_pad(a):
            # 1-pixel ReflectionPad2d built in VMEM (no HBM traffic):
            # pad cols with cols 1 / W-2, then rows with rows 1 / H-2.
            a = jnp.concatenate([a[:, 1:2], a, a[:, W - 2:W - 1]], axis=1)   # (H, W+2)
            a = jnp.concatenate([a[1:2, :], a, a[H - 2:H - 1, :]], axis=0)   # (H+2, W+2)
            return a

        xp = reflect_pad(x)
        yp = reflect_pad(y)

        def box_sum(a):
            # Separable 3x3 box *sum* (valid) on a reflect-padded (H+2, W+2)
            # array: one horizontal 3-tap, one vertical 3-tap (no 1/9 — folded
            # into C1S/C2S).
            h = a[:, 0:W] + a[:, 1:W + 1] + a[:, 2:W + 2]        # (H+2, W)
            return h[0:H, :] + h[1:H + 1, :] + h[2:H + 2, :]     # (H, W)

        sx = box_sum(xp)
        sy = box_sum(yp)
        sxx = box_sum(xp * xp)
        syy = box_sum(yp * yp)
        sxy = box_sum(xp * yp)

        # SSIM expressed directly in box sums:
        #   n = (2*mu_x*mu_y + C1) * (2*sigma_xy + C2)
        #   d = (mu_x^2 + mu_y^2 + C1) * (sigma_x + sigma_y + C2)
        # with mu = S/9, sigma = Sqq/9 - S^2/81; the 1/81 factors cancel in n/d.
        sxsy = sx * sy
        sx2 = sx * sx
        sy2 = sy * sy
        ssim_n = (2.0 * sxsy + C1S) * (18.0 * sxy - 2.0 * sxsy + C2S)
        ssim_d = (sx2 + sy2 + C1S) * (9.0 * (sxx + syy) - sx2 - sy2 + C2S)

        # EUP reciprocal (approx): off the VALU critical path.  The 0.85/C and
        # 0.5 weights are folded into the clip:  w*clip(v,0,1) == clip(w*v,0,w).
        ssim_w = jnp.clip(
            (1.0 - ssim_n * pl.reciprocal(ssim_d, approx=True)) * HALF_W_SSIM,
            0.0, W_SSIM)

        # Per-channel contribution of 0.85*SSIM.mean(C) + 0.15*L1.mean(C),
        # accumulated directly into the resident output block.
        out_ref[0, 0] += ssim_w + W_L1 * jnp.abs(y - x)

    return kernel


def reprojection_loss(prediction, target):
    """Pallas implementation of ReprojectionLoss.forward (NCHW inputs)."""
    B, C, H, W = prediction.shape
    kernel = _make_kernel(C, H, W)
    # TODO(synk): for very large H*W, add a row-tiled grid axis with a 2-row
    # halo (manual halo DMA / pl.Element) to bound per-block VMEM further.
    return pl.pallas_call(
        kernel,
        out_shape=jax.ShapeDtypeStruct((B, 1, H, W), jnp.float32),
        grid=(B, C),
        in_specs=[
            pl.BlockSpec((1, 1, H, W), lambda b, c: (b, c, 0, 0)),
            pl.BlockSpec((1, 1, H, W), lambda b, c: (b, c, 0, 0)),
        ],
        out_specs=pl.BlockSpec((1, 1, H, W), lambda b, c: (b, 0, 0, 0)),
        compiler_params=pltpu.CompilerParams(
            dimension_semantics=("parallel", "arbitrary")),
    )(prediction, target)


def _reference(prediction, target):
    """Pure-JAX reference mirroring the PyTorch module."""
    C1 = 0.01 ** 2
    C2 = 0.03 ** 2
    B, C, H, W = prediction.shape
    xp = jnp.pad(prediction, ((0, 0), (0, 0), (1, 1), (1, 1)), mode="reflect")
    yp = jnp.pad(target, ((0, 0), (0, 0), (1, 1), (1, 1)), mode="reflect")

    def avg3(a):
        s = jnp.zeros((B, C, H, W), jnp.float32)
        for di in range(3):
            for dj in range(3):
                s = s + a[:, :, di:di + H, dj:dj + W]
        return s / 9.0

    mu_x, mu_y = avg3(xp), avg3(yp)
    sigma_x = avg3(xp * xp) - mu_x ** 2
    sigma_y = avg3(yp * yp) - mu_y ** 2
    sigma_xy = avg3(xp * yp) - mu_x * mu_y
    ssim_n = (2 * mu_x * mu_y + C1) * (2 * sigma_xy + C2)
    ssim_d = (mu_x ** 2 + mu_y ** 2 + C1) * (sigma_x + sigma_y + C2)
    ssim = jnp.clip((1 - ssim_n / ssim_d) / 2, 0.0, 1.0)
    l1 = jnp.abs(target - prediction).mean(axis=1, keepdims=True)
    return 0.85 * ssim.mean(axis=1, keepdims=True) + 0.15 * l1


if __name__ == "__main__":
    key = jax.random.PRNGKey(0)
    k1, k2 = jax.random.split(key)
    B, C, H, W = 2, 4, 16, 16
    prediction = jax.random.uniform(k1, (B, C, H, W), dtype=jnp.float32)
    target = jax.random.uniform(k2, (B, C, H, W), dtype=jnp.float32)

    out = jax.block_until_ready(reprojection_loss(prediction, target))
    ref = _reference(prediction, target)

    assert out.shape == (B, 1, H, W)
    max_err = float(jnp.max(jnp.abs(out - ref)))
    # 2e-3 tolerance accounts for pl.reciprocal(approx=True); exact division
    # matches the reference to <=1e-5.
    assert jnp.allclose(out, ref, rtol=2e-3, atol=2e-3), (
        f"mismatch vs reference (max abs err {max_err})")

    print("KERNEL_OK")
</pallas_src>

<mosaic_0001>
module attributes {stable_mosaic.version = 11 : i64} {
  func.func @kernel(%arg0: i32, %arg1: i32, %arg2: memref<1x1x16x16xf32, #tpu.memory_space<vmem>>, %arg3: memref<1x1x16x16xf32, #tpu.memory_space<vmem>>, %arg4: memref<1x1x16x16xf32, #tpu.memory_space<vmem>>) attributes {dimension_semantics = [#tpu.dimension_semantics<parallel>, #tpu.dimension_semantics<arbitrary>], iteration_bounds = array<i64: 2, 4>, scalar_prefetch = 0 : i64, scratch_operands = 0 : i64, tpu.core_type = #tpu.core_type<tc>, window_params = [{transform_indices = @transform_0, window_bounds = array<i64: 1, 1, 16, 16>}, {transform_indices = @transform_1, window_bounds = array<i64: 1, 1, 16, 16>}, {transform_indices = @transform_2, window_bounds = array<i64: 1, 1, 16, 16>}]} {
    %c0_i32 = arith.constant 0 : i32
    %0 = arith.cmpi eq, %arg1, %c0_i32 : i32
    %1 = arith.extui %0 : i1 to i32
    %c0_i32_0 = arith.constant 0 : i32
    %2 = arith.cmpi ne, %1, %c0_i32_0 : i32
    scf.if %2 {
      %cst_28 = arith.constant 0.000000e+00 : f32
      %119 = vector.broadcast %cst_28 : f32 to vector<1x1x16x16xf32>
      %c0_29 = arith.constant 0 : index
      %c0_30 = arith.constant 0 : index
      %c0_31 = arith.constant 0 : index
      %c0_32 = arith.constant 0 : index
      %120 = vector.load %arg4[%c0_29, %c0_30, %c0_31, %c0_32] : memref<1x1x16x16xf32, #tpu.memory_space<vmem>>, vector<1x1x16x16xf32>
      tpu.vector_store %arg4[%c0_29, %c0_30, %c0_31, %c0_32], %119 {strides = array<i32>} : memref<1x1x16x16xf32, #tpu.memory_space<vmem>>, vector<1x1x16x16xf32>,
    } else {
    }
    %c0 = arith.constant 0 : index
    %c0_1 = arith.constant 0 : index
    %c0_2 = arith.constant 0 : index
    %c0_3 = arith.constant 0 : index
    %3 = vector.load %arg2[%c0, %c0_1, %c0_2, %c0_3] : memref<1x1x16x16xf32, #tpu.memory_space<vmem>>, vector<1x1x16x16xf32>
    %4 = vector.shape_cast %3 : vector<1x1x16x16xf32> to vector<16x16xf32>
    %c0_4 = arith.constant 0 : index
    %c0_5 = arith.constant 0 : index
    %c0_6 = arith.constant 0 : index
    %c0_7 = arith.constant 0 : index
    %5 = vector.load %arg3[%c0_4, %c0_5, %c0_6, %c0_7] : memref<1x1x16x16xf32, #tpu.memory_space<vmem>>, vector<1x1x16x16xf32>
    %6 = vector.shape_cast %5 : vector<1x1x16x16xf32> to vector<16x16xf32>
    %7 = vector.extract_strided_slice %4 {offsets = [0, 1], sizes = [16, 1], strides = [1, 1]} : vector<16x16xf32> to vector<16x1xf32>
    %8 = vector.extract_strided_slice %4 {offsets = [0, 14], sizes = [16, 1], strides = [1, 1]} : vector<16x16xf32> to vector<16x1xf32>
    %9 = tpu.concatenate %7, %4, %8 in 1 : vector<16x1xf32>, vector<16x16xf32>, vector<16x1xf32> -> vector<16x18xf32>
    %10 = vector.extract_strided_slice %9 {offsets = [1, 0], sizes = [1, 18], strides = [1, 1]} : vector<16x18xf32> to vector<1x18xf32>
    %11 = vector.extract_strided_slice %9 {offsets = [14, 0], sizes = [1, 18], strides = [1, 1]} : vector<16x18xf32> to vector<1x18xf32>
    %12 = tpu.concatenate %10, %9, %11 in 0 : vector<1x18xf32>, vector<16x18xf32>, vector<1x18xf32> -> vector<18x18xf32>
    %13 = vector.extract_strided_slice %6 {offsets = [0, 1], sizes = [16, 1], strides = [1, 1]} : vector<16x16xf32> to vector<16x1xf32>
    %14 = vector.extract_strided_slice %6 {offsets = [0, 14], sizes = [16, 1], strides = [1, 1]} : vector<16x16xf32> to vector<16x1xf32>
    %15 = tpu.concatenate %13, %6, %14 in 1 : vector<16x1xf32>, vector<16x16xf32>, vector<16x1xf32> -> vector<16x18xf32>
    %16 = vector.extract_strided_slice %15 {offsets = [1, 0], sizes = [1, 18], strides = [1, 1]} : vector<16x18xf32> to vector<1x18xf32>
    %17 = vector.extract_strided_slice %15 {offsets = [14, 0], sizes = [1, 18], strides = [1, 1]} : vector<16x18xf32> to vector<1x18xf32>
    %18 = tpu.concatenate %16, %15, %17 in 0 : vector<1x18xf32>, vector<16x18xf32>, vector<1x18xf32> -> vector<18x18xf32>
    %19 = vector.extract_strided_slice %12 {offsets = [0, 0], sizes = [18, 16], strides = [1, 1]} : vector<18x18xf32> to vector<18x16xf32>
    %20 = vector.extract_strided_slice %12 {offsets = [0, 1], sizes = [18, 16], strides = [1, 1]} : vector<18x18xf32> to vector<18x16xf32>
    %21 = arith.addf %19, %20 : vector<18x16xf32>
    %22 = vector.extract_strided_slice %12 {offsets = [0, 2], sizes = [18, 16], strides = [1, 1]} : vector<18x18xf32> to vector<18x16xf32>
    %23 = arith.addf %21, %22 : vector<18x16xf32>
    %24 = vector.extract_strided_slice %23 {offsets = [0, 0], sizes = [16, 16], strides = [1, 1]} : vector<18x16xf32> to vector<16x16xf32>
    %25 = vector.extract_strided_slice %23 {offsets = [1, 0], sizes = [16, 16], strides = [1, 1]} : vector<18x16xf32> to vector<16x16xf32>
    %26 = arith.addf %24, %25 : vector<16x16xf32>
    %27 = vector.extract_strided_slice %23 {offsets = [2, 0], sizes = [16, 16], strides = [1, 1]} : vector<18x16xf32> to vector<16x16xf32>
    %28 = arith.addf %26, %27 : vector<16x16xf32>
    %29 = vector.extract_strided_slice %18 {offsets = [0, 0], sizes = [18, 16], strides = [1, 1]} : vector<18x18xf32> to vector<18x16xf32>
    %30 = vector.extract_strided_slice %18 {offsets = [0, 1], sizes = [18, 16], strides = [1, 1]} : vector<18x18xf32> to vector<18x16xf32>
    %31 = arith.addf %29, %30 : vector<18x16xf32>
    %32 = vector.extract_strided_slice %18 {offsets = [0, 2], sizes = [18, 16], strides = [1, 1]} : vector<18x18xf32> to vector<18x16xf32>
    %33 = arith.addf %31, %32 : vector<18x16xf32>
    %34 = vector.extract_strided_slice %33 {offsets = [0, 0], sizes = [16, 16], strides = [1, 1]} : vector<18x16xf32> to vector<16x16xf32>
    %35 = vector.extract_strided_slice %33 {offsets = [1, 0], sizes = [16, 16], strides = [1, 1]} : vector<18x16xf32> to vector<16x16xf32>
    %36 = arith.addf %34, %35 : vector<16x16xf32>
    %37 = vector.extract_strided_slice %33 {offsets = [2, 0], sizes = [16, 16], strides = [1, 1]} : vector<18x16xf32> to vector<16x16xf32>
    %38 = arith.addf %36, %37 : vector<16x16xf32>
    %39 = arith.mulf %12, %12 : vector<18x18xf32>
    %40 = vector.extract_strided_slice %39 {offsets = [0, 0], sizes = [18, 16], strides = [1, 1]} : vector<18x18xf32> to vector<18x16xf32>
    %41 = vector.extract_strided_slice %39 {offsets = [0, 1], sizes = [18, 16], strides = [1, 1]} : vector<18x18xf32> to vector<18x16xf32>
    %42 = arith.addf %40, %41 : vector<18x16xf32>
    %43 = vector.extract_strided_slice %39 {offsets = [0, 2], sizes = [18, 16], strides = [1, 1]} : vector<18x18xf32> to vector<18x16xf32>
    %44 = arith.addf %42, %43 : vector<18x16xf32>
    %45 = vector.extract_strided_slice %44 {offsets = [0, 0], sizes = [16, 16], strides = [1, 1]} : vector<18x16xf32> to vector<16x16xf32>
    %46 = vector.extract_strided_slice %44 {offsets = [1, 0], sizes = [16, 16], strides = [1, 1]} : vector<18x16xf32> to vector<16x16xf32>
    %47 = arith.addf %45, %46 : vector<16x16xf32>
    %48 = vector.extract_strided_slice %44 {offsets = [2, 0], sizes = [16, 16], strides = [1, 1]} : vector<18x16xf32> to vector<16x16xf32>
    %49 = arith.addf %47, %48 : vector<16x16xf32>
    %50 = arith.mulf %18, %18 : vector<18x18xf32>
    %51 = vector.extract_strided_slice %50 {offsets = [0, 0], sizes = [18, 16], strides = [1, 1]} : vector<18x18xf32> to vector<18x16xf32>
    %52 = vector.extract_strided_slice %50 {offsets = [0, 1], sizes = [18, 16], strides = [1, 1]} : vector<18x18xf32> to vector<18x16xf32>
    %53 = arith.addf %51, %52 : vector<18x16xf32>
    %54 = vector.extract_strided_slice %50 {offsets = [0, 2], sizes = [18, 16], strides = [1, 1]} : vector<18x18xf32> to vector<18x16xf32>
    %55 = arith.addf %53, %54 : vector<18x16xf32>
    %56 = vector.extract_strided_slice %55 {offsets = [0, 0], sizes = [16, 16], strides = [1, 1]} : vector<18x16xf32> to vector<16x16xf32>
    %57 = vector.extract_strided_slice %55 {offsets = [1, 0], sizes = [16, 16], strides = [1, 1]} : vector<18x16xf32> to vector<16x16xf32>
    %58 = arith.addf %56, %57 : vector<16x16xf32>
    %59 = vector.extract_strided_slice %55 {offsets = [2, 0], sizes = [16, 16], strides = [1, 1]} : vector<18x16xf32> to vector<16x16xf32>
    %60 = arith.addf %58, %59 : vector<16x16xf32>
    %61 = arith.mulf %12, %18 : vector<18x18xf32>
    %62 = vector.extract_strided_slice %61 {offsets = [0, 0], sizes = [18, 16], strides = [1, 1]} : vector<18x18xf32> to vector<18x16xf32>
    %63 = vector.extract_strided_slice %61 {offsets = [0, 1], sizes = [18, 16], strides = [1, 1]} : vector<18x18xf32> to vector<18x16xf32>
    %64 = arith.addf %62, %63 : vector<18x16xf32>
    %65 = vector.extract_strided_slice %61 {offsets = [0, 2], sizes = [18, 16], strides = [1, 1]} : vector<18x18xf32> to vector<18x16xf32>
    %66 = arith.addf %64, %65 : vector<18x16xf32>
    %67 = vector.extract_strided_slice %66 {offsets = [0, 0], sizes = [16, 16], strides = [1, 1]} : vector<18x16xf32> to vector<16x16xf32>
    %68 = vector.extract_strided_slice %66 {offsets = [1, 0], sizes = [16, 16], strides = [1, 1]} : vector<18x16xf32> to vector<16x16xf32>
    %69 = arith.addf %67, %68 : vector<16x16xf32>
    %70 = vector.extract_strided_slice %66 {offsets = [2, 0], sizes = [16, 16], strides = [1, 1]} : vector<18x16xf32> to vector<16x16xf32>
    %71 = arith.addf %69, %70 : vector<16x16xf32>
    %72 = arith.mulf %28, %38 : vector<16x16xf32>
    %73 = arith.mulf %28, %28 : vector<16x16xf32>
    %74 = arith.mulf %38, %38 : vector<16x16xf32>
    %cst = arith.constant 2.000000e+00 : f32
    %75 = vector.broadcast %cst : f32 to vector<16x16xf32>
    %76 = arith.mulf %75, %72 : vector<16x16xf32>
    %cst_8 = arith.constant 8.100000e-03 : f32
    %77 = vector.broadcast %cst_8 : f32 to vector<16x16xf32>
    %78 = arith.addf %76, %77 : vector<16x16xf32>
    %cst_9 = arith.constant 1.800000e+01 : f32
    %79 = vector.broadcast %cst_9 : f32 to vector<16x16xf32>
    %80 = arith.mulf %79, %71 : vector<16x16xf32>
    %cst_10 = arith.constant 2.000000e+00 : f32
    %81 = vector.broadcast %cst_10 : f32 to vector<16x16xf32>
    %82 = arith.mulf %81, %72 : vector<16x16xf32>
    %83 = arith.subf %80, %82 : vector<16x16xf32>
    %cst_11 = arith.constant 7.290000e-02 : f32
    %84 = vector.broadcast %cst_11 : f32 to vector<16x16xf32>
    %85 = arith.addf %83, %84 : vector<16x16xf32>
    %86 = arith.mulf %78, %85 : vector<16x16xf32>
    %87 = arith.addf %73, %74 : vector<16x16xf32>
    %cst_12 = arith.constant 8.100000e-03 : f32
    %88 = vector.broadcast %cst_12 : f32 to vector<16x16xf32>
    %89 = arith.addf %87, %88 : vector<16x16xf32>
    %90 = arith.addf %49, %60 : vector<16x16xf32>
    %cst_13 = arith.constant 9.000000e+00 : f32
    %91 = vector.broadcast %cst_13 : f32 to vector<16x16xf32>
    %92 = arith.mulf %91, %90 : vector<16x16xf32>
    %93 = arith.subf %92, %73 : vector<16x16xf32>
    %94 = arith.subf %93, %74 : vector<16x16xf32>
    %cst_14 = arith.constant 7.290000e-02 : f32
    %95 = vector.broadcast %cst_14 : f32 to vector<16x16xf32>
    %96 = arith.addf %94, %95 : vector<16x16xf32>
    %97 = arith.mulf %89, %96 : vector<16x16xf32>
    %98 = tpu.reciprocal %97 {approx = true} : vector<16x16xf32> -> vector<16x16xf32>
    %99 = arith.mulf %86, %98 : vector<16x16xf32>
    %cst_15 = arith.constant 1.000000e+00 : f32
    %100 = vector.broadcast %cst_15 : f32 to vector<16x16xf32>
    %101 = arith.subf %100, %99 : vector<16x16xf32>
    %cst_16 = arith.constant 1.062500e-01 : f32
    %102 = vector.broadcast %cst_16 : f32 to vector<16x16xf32>
    %103 = arith.mulf %101, %102 : vector<16x16xf32>
    %cst_17 = arith.constant 0.000000e+00 : f32
    %cst_18 = arith.constant 2.125000e-01 : f32
    %104 = vector.broadcast %cst_17 : f32 to vector<16x16xf32>
    %105 = arith.maximumf %104, %103 : vector<16x16xf32>
    %106 = vector.broadcast %cst_18 : f32 to vector<16x16xf32>
    %107 = arith.minimumf %106, %105 : vector<16x16xf32>
    %c0_19 = arith.constant 0 : index
    %c0_20 = arith.constant 0 : index
    %c0_21 = arith.constant 0 : index
    %c0_22 = arith.constant 0 : index
    %108 = vector.load %arg4[%c0_19, %c0_20, %c0_21, %c0_22] : memref<1x1x16x16xf32, #tpu.memory_space<vmem>>, vector<1x1x16x16xf32>
    %109 = vector.shape_cast %108 : vector<1x1x16x16xf32> to vector<16x16xf32>
    %110 = arith.subf %6, %4 : vector<16x16xf32>
    %111 = math.absf %110 : vector<16x16xf32>
    %cst_23 = arith.constant 3.750000e-02 : f32
    %112 = vector.broadcast %cst_23 : f32 to vector<16x16xf32>
    %113 = arith.mulf %112, %111 : vector<16x16xf32>
    %114 = arith.addf %107, %113 : vector<16x16xf32>
    %115 = arith.addf %109, %114 : vector<16x16xf32>
    %c0_24 = arith.constant 0 : index
    %c0_25 = arith.constant 0 : index
    %c0_26 = arith.constant 0 : index
    %c0_27 = arith.constant 0 : index
    %116 = vector.load %arg4[%c0_24, %c0_25, %c0_26, %c0_27] : memref<1x1x16x16xf32, #tpu.memory_space<vmem>>, vector<1x1x16x16xf32>
    %117 = vector.shape_cast %116 : vector<1x1x16x16xf32> to vector<16x16xf32>
    %118 = vector.shape_cast %115 : vector<16x16xf32> to vector<1x1x16x16xf32>
    tpu.vector_store %arg4[%c0_24, %c0_25, %c0_26, %c0_27], %118 {strides = array<i32>} : memref<1x1x16x16xf32, #tpu.memory_space<vmem>>, vector<1x1x16x16xf32>,
    return
  }
  func.func @transform_0(%arg0: i32, %arg1: i32) -> (i32, i32, i32, i32) {
    %c0_i32 = arith.constant 0 : i32
    %c0_i32_0 = arith.constant 0 : i32
    %c0_i32_1 = arith.constant 0 : i32
    return %arg0, %arg1, %c0_i32, %c0_i32_0 : i32, i32, i32, i32
  }
  func.func @transform_1(%arg0: i32, %arg1: i32) -> (i32, i32, i32, i32) {
    %c0_i32 = arith.constant 0 : i32
    %c0_i32_0 = arith.constant 0 : i32
    %c0_i32_1 = arith.constant 0 : i32
    return %arg0, %arg1, %c0_i32, %c0_i32_0 : i32, i32, i32, i32
  }
  func.func @transform_2(%arg0: i32, %arg1: i32) -> (i32, i32, i32, i32) {
    %c0_i32 = arith.constant 0 : i32
    %c0_i32_0 = arith.constant 0 : i32
    %c0_i32_1 = arith.constant 0 : i32
    %c0_i32_2 = arith.constant 0 : i32
    return %arg0, %c0_i32, %c0_i32_0, %c0_i32_1 : i32, i32, i32, i32
  }
}

</mosaic_0001>

<llo_original>
// kernel: tpu_custom_call.1
$region0: #{tpu_custom_call.1}
  #allocation0 [shape = 'u32[]', space=smem, size = 0x4, offset = 0x4, fixed_abs, tag = 'smem constant byte address 0x4 - core index']
  #allocation1 [shape = 'u32[144,128]{1,0:T(1,128)}', space=vmem, size = 0x12000, scoped, tag = 'internal scratch']
  %s0 = inlined_call_operand.hbm [shape: f32[2,4,16,16], index: 0, kind: input, shape index: {}]
  %s1 = inlined_call_operand.hbm [shape: f32[2,4,16,16], index: 1, kind: input, shape index: {}]
  %s2 = inlined_call_operand.hbm [shape: f32[2,1,16,16], index: 2, kind: output, shape index: {}]
  %s3 = sld [smem:[#allocation0]]
  $region53: #{tpu_custom_call.1} parent=0
    _
  %s5 = ssub.s32 1, %s3
  %s6 = scalar_select 0, %s5, %s3
  $region1: #{tpu_custom_call.1} parent=0
    #allocation2 [shape = 'u8[16384]{0}', space=vmem, size = 0x4000, scoped, tag = 'input window, operand 0']
    #allocation3 [shape = 's32[2]{0}', space=sflag, size = 0x8, scoped, tag = 'scoped memory for tpu_custom_call.1']
    #allocation4 [shape = 's32[2]{0}', space=sflag, size = 0x8, scoped, tag = 'scoped memory for tpu_custom_call.1']
    #allocation5 [shape = 'u8[16384]{0}', space=vmem, size = 0x4000, scoped, tag = 'input window, operand 1']
    #allocation6 [shape = 's32[2]{0}', space=sflag, size = 0x8, scoped, tag = 'scoped memory for tpu_custom_call.1']
    #allocation7 [shape = 'u8[16384]{0}', space=vmem, size = 0x4000, scoped, tag = 'output window, operand 0']
    %7 = vsyncpa [#allocation3], 0
    %s8 = scalar_lea.sflag [#allocation3], 1
    %9 = vsyncpa %s8, 0
    %10 = vsyncpa [#allocation6], 0
    %s11 = scalar_lea.sflag [#allocation6], 1
    %12 = vsyncpa %s11, 0
    %13 = vsyncpa [#allocation4], 0
    %s14 = scalar_lea.sflag [#allocation4], 1
    %15 = vsyncpa %s14, 0
    loop: start=0, step=1, limit=10
    $region2: #{tpu_custom_call.1} parent=1 // loop_pre_header
      _
    $region3: #{tpu_custom_call.1} parent=1 // loop_header
      %s17 = sphi 0, %s21
      %p18 = scmp.ge.s32.totalorder %s17, 10
      %s24 = sphi 0, %s36
      %s25 = sphi 0, %s32
      %s26 = sphi 0, %s24
      %s27 = sphi 0, %s25
      %s28 = sphi 0, %s26
      %s29 = sphi 0, %s27
      %s41 = sphi 0, %s43
      %s44 = sphi 0, %s41
      %s45 = sphi 0, %s44
      %s61 = sphi 0, %s45
      %s69 = sphi 0, %s71
      %s72 = sphi 0, %s69
      %s73 = sphi 0, %s72
      %s89 = sphi 0, %s73
      %s95 = sphi 0, %s97
      %s98 = sphi 0, %s95
      %s99 = sphi 0, %s98
      %s115 = sphi 0, %s99
    $region4: #{tpu_custom_call.1} parent=1 // loop_header_branch
      %20 = sbr.rel (%p18) target = $region8
    $region5: #{tpu_custom_call.1} parent=1 // loop_body
      %s22 = ssub.s32 %s17, 1
      %s23 = ssub.s32 %s17, 2
      %s30 = sadd.s32 1, %s25
      %p31 = scmp.ge.s32.totalorder %s30, 4
      %s32 = scalar_select %p31, 0, %s30
      %s33 = sadd.s32 1, %s24
      %s34 = scalar_select %p31, %s33, %s24
      %p35 = scmp.ge.s32.totalorder %s34, 2
      %s36 = scalar_select %p35, 0, %s34
      %s37 = ssub.s32 %s24, %s36
      %s38 = ssub.s32 %s25, %s32
      %s39 = sor.u32 %s37, %s38
      %p40 = scmp.eq.s32.totalorder %s39, 0
      %s42 = sadd.s32 %s41, 1
      %s43 = scalar_select %p40, %s41, %s42
      %p46 = pneg %p40
      %p47 = scmp.eq.s32.totalorder %s17, 7
      %p48 = por %p46, %p47
      %p49 = scmp.ne.s32.totalorder %s41, %s44
      %p50 = scmp.eq.s32.totalorder %s17, 0
      %p51 = por %p49, %p50
      %p52 = scmp.ne.s32.totalorder %s41, %s44
      %p53 = scmp.eq.s32.totalorder %s22, 7
      %p54 = por %p52, %p53
      %p55 = scmp.ne.s32.totalorder %s44, %s45
      %p56 = scmp.eq.s32.totalorder %s22, 0
      %p57 = por %p55, %p56
      %p58 = scmp.ne.s32.totalorder %s44, %s45
      %p59 = scmp.eq.s32.totalorder %s23, 7
      %p60 = por %p58, %p59
      %p62 = scmp.ne.s32.totalorder %s45, %s61
      %p63 = scmp.eq.s32.totalorder %s23, 0
      %p64 = por %p62, %p63
      %s65 = ssub.s32 %s24, %s36
      %s66 = ssub.s32 %s25, %s32
      %s67 = sor.u32 %s65, %s66
      %p68 = scmp.eq.s32.totalorder %s67, 0
      %s70 = sadd.s32 %s69, 1
      %s71 = scalar_select %p68, %s69, %s70
      %p74 = pneg %p68
      %p75 = scmp.eq.s32.totalorder %s17, 7
      %p76 = por %p74, %p75
      %p77 = scmp.ne.s32.totalorder %s69, %s72
      %p78 = scmp.eq.s32.totalorder %s17, 0
      %p79 = por %p77, %p78
      %p80 = scmp.ne.s32.totalorder %s69, %s72
      %p81 = scmp.eq.s32.totalorder %s22, 7
      %p82 = por %p80, %p81
      %p83 = scmp.ne.s32.totalorder %s72, %s73
      %p84 = scmp.eq.s32.totalorder %s22, 0
      %p85 = por %p83, %p84
      %p86 = scmp.ne.s32.totalorder %s72, %s73
      %p87 = scmp.eq.s32.totalorder %s23, 7
      %p88 = por %p86, %p87
      %p90 = scmp.ne.s32.totalorder %s73, %s89
      %p91 = scmp.eq.s32.totalorder %s23, 0
      %p92 = por %p90, %p91
      %s93 = ssub.s32 %s24, %s36
      %p94 = scmp.eq.s32.totalorder %s93, 0
      %s96 = sadd.s32 %s95, 1
      %s97 = scalar_select %p94, %s95, %s96
      %p100 = pneg %p94
      %p101 = scmp.eq.s32.totalorder %s17, 7
      %p102 = por %p100, %p101
      %p103 = scmp.ne.s32.totalorder %s95, %s98
      %p104 = scmp.eq.s32.totalorder %s17, 0
      %p105 = por %p103, %p104
      %p106 = scmp.ne.s32.totalorder %s95, %s98
      %p107 = scmp.eq.s32.totalorder %s22, 7
      %p108 = por %p106, %p107
      %p109 = scmp.ne.s32.totalorder %s98, %s99
      %p110 = scmp.eq.s32.totalorder %s22, 0
      %p111 = por %p109, %p110
      %p112 = scmp.ne.s32.totalorder %s98, %s99
      %p113 = scmp.eq.s32.totalorder %s23, 7
      %p114 = por %p112, %p113
      %p116 = scmp.ne.s32.totalorder %s99, %s115
      %p117 = scmp.eq.s32.totalorder %s23, 0
      %p118 = por %p116, %p117
      %p119 = scmp.le.s32.totalorder 1, %s17
      %p120 = scmp.lt.s32.totalorder %s17, 9
      %p121 = pnand %p119, %p120
      %p122 = pneg %p121
      // Predicated region
      $region9: #{tpu_custom_call.1} parent=5 // pred_check
        _
      $region10: #{tpu_custom_call.1} parent=5 // pred_check_branch
        %124 = sbr.rel (%p121) target = $region12
      $region11: #{tpu_custom_call.1} parent=5 // pred_region
        %s125 = ssub.s32 %s17, 1
      $region12: #{tpu_custom_call.1} parent=5 // pred_fallthru
        _
      %p126 = scmp.lt.s32.totalorder %s17, 8
      // Predicated region
      $region13: #{tpu_custom_call.1} parent=5 // pred_check
        %p127 = pneg %p126
      $region14: #{tpu_custom_call.1} parent=5 // pred_check_branch
        %129 = sbr.rel (%p127) target = $region16
      $region15: #{tpu_custom_call.1} parent=5 // pred_region
        // Predicated region
        $region17: #{tpu_custom_call.1} parent=15 // pred_check
          %p130 = pneg %p51
        $region18: #{tpu_custom_call.1} parent=15 // pred_check_branch
          %132 = sbr.rel (%p130) target = $region20
        $region19: #{tpu_custom_call.1} parent=15 // pred_region
          %s133 = sand.u32 %s41, 1
          %s134 = scalar_lea.sflag [#allocation3], %s133
          %s135 = sand.u32 %s41, 1
          %s136 = smul.addr %s135, 16
          %s137 = scalar_lea.vmem [#allocation2], %s136
          %s139 = ssub.s32 256, 256
          %140 = vsyncadd %s134, %s139
          %s141 = smul.addr %s25, 2
          %s142 = smul.addr %s24, 8
          %s143 = sadd.s32 %s141, %s142
          %s144 = smul.addr %s143, 128
          %s145 = scalar_lea.hbm %s0, %s144
          %s146 = sshll.u32 %s137, 4
          %s147 = int_to_ptr.vmem [resolvable:$true] %s146
          %152 = dma.hbm_to_vmem [thread:$0]  %s145, 256, %s147, %s134, 128, 128, 8
        $region20: #{tpu_custom_call.1} parent=15 // pred_fallthru
          _
        // Predicated region
        $region21: #{tpu_custom_call.1} parent=15 // pred_check
          %p153 = pneg %p79
        $region22: #{tpu_custom_call.1} parent=15 // pred_check_branch
          %155 = sbr.rel (%p153) target = $region24
        $region23: #{tpu_custom_call.1} parent=15 // pred_region
          %s156 = sand.u32 %s69, 1
          %s157 = scalar_lea.sflag [#allocation6], %s156
          %s158 = sand.u32 %s69, 1
          %s159 = smul.addr %s158, 16
          %s160 = scalar_lea.vmem [#allocation5], %s159
          %s162 = ssub.s32 256, 256
          %163 = vsyncadd %s157, %s162
          %s164 = smul.addr %s25, 2
          %s165 = smul.addr %s24, 8
          %s166 = sadd.s32 %s164, %s165
          %s167 = smul.addr %s166, 128
          %s168 = scalar_lea.hbm %s1, %s167
          %s169 = sshll.u32 %s160, 4
          %s170 = int_to_ptr.vmem [resolvable:$true] %s169
          %175 = dma.hbm_to_vmem [thread:$0]  %s168, 256, %s170, %s157, 128, 128, 8
        $region24: #{tpu_custom_call.1} parent=15 // pred_fallthru
          _
      $region16: #{tpu_custom_call.1} parent=5 // pred_fallthru
        _
      %p176 = scmp.le.s32.totalorder 1, %s17
      %p177 = scmp.lt.s32.totalorder %s17, 9
      %p178 = pnand %p176, %p177
      %p179 = pneg %p178
      // Predicated region
      $region25: #{tpu_custom_call.1} parent=5 // pred_check
        _
      $region26: #{tpu_custom_call.1} parent=5 // pred_check_branch
        %181 = sbr.rel (%p178) target = $region28
      $region27: #{tpu_custom_call.1} parent=5 // pred_region
        %s182 = ssub.s32 %s17, 1
        %s183 = sand.u32 %s44, 1
        %s184 = scalar_lea.sflag [#allocation3], %s183
        %s185 = sand.u32 %s44, 1
        %s186 = smul.addr %s185, 16
        %s187 = scalar_lea.vmem [#allocation2], %s186
        // Predicated region
        $region29: #{tpu_custom_call.1} parent=27 // pred_check
          %p188 = pneg %p57
        $region30: #{tpu_custom_call.1} parent=27 // pred_check_branch
          %190 = sbr.rel (%p188) target = $region32
        $region31: #{tpu_custom_call.1} parent=27 // pred_region
          %191 = dma.done %s184, 256
        $region32: #{tpu_custom_call.1} parent=27 // pred_fallthru
          _
        %s192 = sand.u32 %s72, 1
        %s193 = scalar_lea.sflag [#allocation6], %s192
        %s194 = sand.u32 %s72, 1
        %s195 = smul.addr %s194, 16
        %s196 = scalar_lea.vmem [#allocation5], %s195
        // Predicated region
        $region33: #{tpu_custom_call.1} parent=27 // pred_check
          %p197 = pneg %p85
        $region34: #{tpu_custom_call.1} parent=27 // pred_check_branch
          %199 = sbr.rel (%p197) target = $region36
        $region35: #{tpu_custom_call.1} parent=27 // pred_region
          %200 = dma.done %s193, 256
        $region36: #{tpu_custom_call.1} parent=27 // pred_fallthru
          _
        %s201 = sand.u32 %s44, 1
        %s202 = scalar_lea.sflag [#allocation3], %s201
        %s203 = sand.u32 %s44, 1
        %s204 = smul.addr %s203, 16
        %s205 = scalar_lea.vmem [#allocation2], %s204
        %p206 = pneg %p57
        %p207 = pneg %p54
        %s208 = sand.u32 %s72, 1
        %s209 = scalar_lea.sflag [#allocation6], %s208
        %s210 = sand.u32 %s72, 1
        %s211 = smul.addr %s210, 16
        %s212 = scalar_lea.vmem [#allocation5], %s211
        %p213 = pneg %p85
        %p214 = pneg %p82
        %p215 = pneg %p111
        %p216 = pneg %p108
        %s217 = sand.u32 %s98, 1
        %s218 = scalar_lea.sflag [#allocation4], %s217
        %s219 = sand.u32 %s98, 1
        %s220 = smul.addr %s219, 16
        %s221 = scalar_lea.vmem [#allocation7], %s220
        %p222 = scmp.eq.s32.totalorder %s27, 0
        // Predicated region
        $region37: #{tpu_custom_call.1} parent=27 // pred_check
          %p223 = pneg %p222
        $region38: #{tpu_custom_call.1} parent=27 // pred_check_branch
          %225 = sbr.rel (%p223) target = $region40
        $region39: #{tpu_custom_call.1} parent=27 // pred_region
          %vm226 = vcmask 130048
          %227 = vst.msk [vmem:[%s221] sm:$0xff] %vm226, 0.0
          %228 = vst.msk [vmem:[%s221 + $0x8] sm:$0xff] %vm226, 0.0
        $region40: #{tpu_custom_call.1} parent=27 // pred_fallthru
          _
        %v229 = vld [vmem:[%s187] sm:$0xff]
        %v230 = vld [vmem:[%s187 + $0x8] sm:$0xff]
        %v231 = vld [vmem:[%s196] sm:$0xff]
        %v232 = vld [vmem:[%s196 + $0x8] sm:$0xff]
        %235 = vrot.lane.b32.xlu0 %v229, 127
        %v236 = vpop.permute.xlu0 %235
        %237 = vrot.lane.b32.xlu0 %v230, 127
        %v238 = vpop.permute.xlu0 %237
        %241 = vrot.lane.b32.xlu0 %v229, 1
        %v242 = vpop.permute.xlu0 %241
        %243 = vrot.lane.b32.xlu0 %v230, 1
        %v244 = vpop.permute.xlu0 %243
        %247 = vrot.lane.b32.xlu0 %v229, 3
        %v248 = vpop.permute.xlu0 %247
        %249 = vrot.lane.b32.xlu0 %v230, 3
        %v250 = vpop.permute.xlu0 %249
        %vm253 = vcmask 7168
        %v254 = vsel %vm253, %v236, %v242
        %v255 = vsel %vm253, %v238, %v244
        %vm256 = vcmask 138240
        %v257 = vsel %vm256, %v254, %v248
        %v258 = vsel %vm256, %v255, %v250
        %v260 = vrot.slane %v257, 1
        %vm263 = vcmask 1040384
        %v264 = vrot.slane %v257, 7
        %v265 = vrot.slane %v258, 7
        %v266 = vsel %vm263, %v264, %v265
        %v270 = vrot.slane %v258, 5
        %v272 = vsel %vm263, %v260, %v264
        %v273 = vsel %vm263, %v265, %v270
        %276 = vrot.lane.b32.xlu0 %v231, 127
        %v277 = vpop.permute.xlu0 %276
        %278 = vrot.lane.b32.xlu0 %v232, 127
        %v279 = vpop.permute.xlu0 %278
        %282 = vrot.lane.b32.xlu0 %v231, 1
        %v283 = vpop.permute.xlu0 %282
        %284 = vrot.lane.b32.xlu0 %v232, 1
        %v285 = vpop.permute.xlu0 %284
        %288 = vrot.lane.b32.xlu0 %v231, 3
        %v289 = vpop.permute.xlu0 %288
        %290 = vrot.lane.b32.xlu0 %v232, 3
        %v291 = vpop.permute.xlu0 %290
        %v294 = vsel %vm253, %v277, %v283
        %v295 = vsel %vm253, %v279, %v285
        %v296 = vsel %vm256, %v294, %v289
        %v297 = vsel %vm256, %v295, %v291
        %v299 = vrot.slane %v296, 1
        %v302 = vrot.slane %v296, 7
        %v303 = vrot.slane %v297, 7
        %v304 = vsel %vm263, %v302, %v303
        %v308 = vrot.slane %v297, 5
        %v310 = vsel %vm263, %v299, %v302
        %v311 = vsel %vm263, %v303, %v308
        %314 = vrot.lane.b32.xlu0 %v272, 127
        %v315 = vpop.permute.xlu0 %314
        %316 = vrot.lane.b32.xlu0 %v266, 127
        %v317 = vpop.permute.xlu0 %316
        %318 = vrot.lane.b32.xlu0 %v273, 127
        %v319 = vpop.permute.xlu0 %318
        %v323 = vadd.f32 %v272, %v315
        %v324 = vadd.f32 %v266, %v317
        %v325 = vadd.f32 %v273, %v319
        %326 = vrot.lane.b32.xlu0 %v272, 126
        %v327 = vpop.permute.xlu0 %326
        %328 = vrot.lane.b32.xlu0 %v266, 126
        %v329 = vpop.permute.xlu0 %328
        %330 = vrot.lane.b32.xlu0 %v273, 126
        %v331 = vpop.permute.xlu0 %330
        %v335 = vadd.f32 %v323, %v327
        %v336 = vadd.f32 %v324, %v329
        %v337 = vadd.f32 %v325, %v331
        %vm341 = vcmask 1046528
        %v342 = vrot.slane %v335, 1
        %v343 = vrot.slane %v336, 1
        %v344 = vsel %vm341, %v342, %v343
        %v345 = vrot.slane %v337, 1
        %v346 = vsel %vm341, %v343, %v345
        %v349 = vadd.f32 %v335, %v344
        %v350 = vadd.f32 %v336, %v346
        %vm351 = vcmask 1045504
        %v352 = vrot.slane %v335, 2
        %v353 = vrot.slane %v336, 2
        %v354 = vsel %vm351, %v352, %v353
        %v355 = vrot.slane %v337, 2
        %v356 = vsel %vm351, %v353, %v355
        %v359 = vadd.f32 %v349, %v354
        %v360 = vadd.f32 %v350, %v356
        %363 = vrot.lane.b32.xlu0 %v310, 127
        %v364 = vpop.permute.xlu0 %363
        %365 = vrot.lane.b32.xlu0 %v304, 127
        %v366 = vpop.permute.xlu0 %365
        %367 = vrot.lane.b32.xlu0 %v311, 127
        %v368 = vpop.permute.xlu0 %367
        %v372 = vadd.f32 %v310, %v364
        %v373 = vadd.f32 %v304, %v366
        %v374 = vadd.f32 %v311, %v368
        %375 = vrot.lane.b32.xlu0 %v310, 126
        %v376 = vpop.permute.xlu0 %375
        %377 = vrot.lane.b32.xlu0 %v304, 126
        %v378 = vpop.permute.xlu0 %377
        %379 = vrot.lane.b32.xlu0 %v311, 126
        %v380 = vpop.permute.xlu0 %379
        %v384 = vadd.f32 %v372, %v376
        %v385 = vadd.f32 %v373, %v378
        %v386 = vadd.f32 %v374, %v380
        %v390 = vrot.slane %v384, 1
        %v391 = vrot.slane %v385, 1
        %v392 = vsel %vm341, %v390, %v391
        %v393 = vrot.slane %v386, 1
        %v394 = vsel %vm341, %v391, %v393
        %v397 = vadd.f32 %v384, %v392
        %v398 = vadd.f32 %v385, %v394
        %v399 = vrot.slane %v384, 2
        %v400 = vrot.slane %v385, 2
        %v401 = vsel %vm351, %v399, %v400
        %v402 = vrot.slane %v386, 2
        %v403 = vsel %vm351, %v400, %v402
        %v406 = vadd.f32 %v397, %v401
        %v407 = vadd.f32 %v398, %v403
        %v408 = vmul.f32 %v272, %v272
        %v409 = vmul.f32 %v266, %v266
        %v410 = vmul.f32 %v273, %v273
        %414 = vrot.lane.b32.xlu0 %v408, 127
        %v415 = vpop.permute.xlu0 %414
        %416 = vrot.lane.b32.xlu0 %v409, 127
        %v417 = vpop.permute.xlu0 %416
        %418 = vrot.lane.b32.xlu0 %v410, 127
        %v419 = vpop.permute.xlu0 %418
        %v423 = vadd.f32 %v408, %v415
        %v424 = vadd.f32 %v409, %v417
        %v425 = vadd.f32 %v410, %v419
        %426 = vrot.lane.b32.xlu0 %v408, 126
        %v427 = vpop.permute.xlu0 %426
        %428 = vrot.lane.b32.xlu0 %v409, 126
        %v429 = vpop.permute.xlu0 %428
        %430 = vrot.lane.b32.xlu0 %v410, 126
        %v431 = vpop.permute.xlu0 %430
        %v435 = vadd.f32 %v423, %v427
        %v436 = vadd.f32 %v424, %v429
        %v437 = vadd.f32 %v425, %v431
        %v441 = vrot.slane %v435, 1
        %v442 = vrot.slane %v436, 1
        %v443 = vsel %vm341, %v441, %v442
        %v444 = vrot.slane %v437, 1
        %v445 = vsel %vm341, %v442, %v444
        %v448 = vadd.f32 %v435, %v443
        %v449 = vadd.f32 %v436, %v445
        %v450 = vrot.slane %v435, 2
        %v451 = vrot.slane %v436, 2
        %v452 = vsel %vm351, %v450, %v451
        %v453 = vrot.slane %v437, 2
        %v454 = vsel %vm351, %v451, %v453
        %v457 = vadd.f32 %v448, %v452
        %v458 = vadd.f32 %v449, %v454
        %v459 = vmul.f32 %v310, %v310
        %v460 = vmul.f32 %v304, %v304
        %v461 = vmul.f32 %v311, %v311
        %465 = vrot.lane.b32.xlu0 %v459, 127
        %v466 = vpop.permute.xlu0 %465
        %467 = vrot.lane.b32.xlu0 %v460, 127
        %v468 = vpop.permute.xlu0 %467
        %469 = vrot.lane.b32.xlu0 %v461, 127
        %v470 = vpop.permute.xlu0 %469
        %v474 = vadd.f32 %v459, %v466
        %v475 = vadd.f32 %v460, %v468
        %v476 = vadd.f32 %v461, %v470
        %477 = vrot.lane.b32.xlu0 %v459, 126
        %v478 = vpop.permute.xlu0 %477
        %479 = vrot.lane.b32.xlu0 %v460, 126
        %v480 = vpop.permute.xlu0 %479
        %481 = vrot.lane.b32.xlu0 %v461, 126
        %v482 = vpop.permute.xlu0 %481
        %v486 = vadd.f32 %v474, %v478
        %v487 = vadd.f32 %v475, %v480
        %v488 = vadd.f32 %v476, %v482
        %v492 = vrot.slane %v486, 1
        %v493 = vrot.slane %v487, 1
        %v494 = vsel %vm341, %v492, %v493
        %v495 = vrot.slane %v488, 1
        %v496 = vsel %vm341, %v493, %v495
        %v499 = vadd.f32 %v486, %v494
        %v500 = vadd.f32 %v487, %v496
        %v501 = vrot.slane %v486, 2
        %v502 = vrot.slane %v487, 2
        %v503 = vsel %vm351, %v501, %v502
        %v504 = vrot.slane %v488, 2
        %v505 = vsel %vm351, %v502, %v504
        %v508 = vadd.f32 %v499, %v503
        %v509 = vadd.f32 %v500, %v505
        %v510 = vmul.f32 %v272, %v310
        %v511 = vmul.f32 %v266, %v304
        %v512 = vmul.f32 %v273, %v311
        %516 = vrot.lane.b32.xlu0 %v510, 127
        %v517 = vpop.permute.xlu0 %516
        %518 = vrot.lane.b32.xlu0 %v511, 127
        %v519 = vpop.permute.xlu0 %518
        %520 = vrot.lane.b32.xlu0 %v512, 127
        %v521 = vpop.permute.xlu0 %520
        %v525 = vadd.f32 %v510, %v517
        %v526 = vadd.f32 %v511, %v519
        %v527 = vadd.f32 %v512, %v521
        %528 = vrot.lane.b32.xlu0 %v510, 126
        %v529 = vpop.permute.xlu0 %528
        %530 = vrot.lane.b32.xlu0 %v511, 126
        %v531 = vpop.permute.xlu0 %530
        %532 = vrot.lane.b32.xlu0 %v512, 126
        %v533 = vpop.permute.xlu0 %532
        %v537 = vadd.f32 %v525, %v529
        %v538 = vadd.f32 %v526, %v531
        %v539 = vadd.f32 %v527, %v533
        %v543 = vrot.slane %v537, 1
        %v544 = vrot.slane %v538, 1
        %v545 = vsel %vm341, %v543, %v544
        %v546 = vrot.slane %v539, 1
        %v547 = vsel %vm341, %v544, %v546
        %v550 = vadd.f32 %v537, %v545
        %v551 = vadd.f32 %v538, %v547
        %v552 = vrot.slane %v537, 2
        %v553 = vrot.slane %v538, 2
        %v554 = vsel %vm351, %v552, %v553
        %v555 = vrot.slane %v539, 2
        %v556 = vsel %vm351, %v553, %v555
        %v559 = vadd.f32 %v550, %v554
        %v560 = vadd.f32 %v551, %v556
        %v561 = vmul.f32 %v359, %v406
        %v562 = vmul.f32 %v360, %v407
        %v563 = vmul.f32 %v359, %v359
        %v564 = vmul.f32 %v360, %v360
        %v565 = vmul.f32 %v406, %v406
        %v566 = vmul.f32 %v407, %v407
        %v567 = vmul.f32 %v561, 2.0
        %v568 = vmul.f32 %v562, 2.0
        %v569 = vadd.f32 %v567, 0.0081
        %v570 = vadd.f32 %v568, 0.0081
        %v571 = vmul.f32 %v559, 18.0
        %v572 = vmul.f32 %v560, 18.0
        %v573 = vsub.f32 %v571, %v567
        %v574 = vsub.f32 %v572, %v568
        %v575 = vadd.f32 %v573, 0.0729
        %v576 = vadd.f32 %v574, 0.0729
        %v577 = vmul.f32 %v569, %v575
        %v578 = vmul.f32 %v570, %v576
        %v579 = vadd.f32 %v563, %v565
        %v580 = vadd.f32 %v564, %v566
        %v581 = vadd.f32 %v579, 0.0081
        %v582 = vadd.f32 %v580, 0.0081
        %v583 = vadd.f32 %v457, %v508
        %v584 = vadd.f32 %v458, %v509
        %v585 = vmul.f32 %v583, 9.0
        %v586 = vmul.f32 %v584, 9.0
        %v587 = vsub.f32 %v585, %v563
        %v588 = vsub.f32 %v586, %v564
        %v589 = vsub.f32 %v587, %v565
        %v590 = vsub.f32 %v588, %v566
        %v591 = vadd.f32 %v589, 0.0729
        %v592 = vadd.f32 %v590, 0.0729
        %v593 = vmul.f32 %v581, %v591
        %v594 = vmul.f32 %v582, %v592
        %v595 = vrcp.pop %v593
        %v596 = vrcp.pop %v594
        %v597 = vmul.f32 %v577, %v595
        %v598 = vmul.f32 %v578, %v596
        %v599 = vsub.f32 1.0, %v597
        %v600 = vsub.f32 1.0, %v598
        %v601 = vmul.f32 %v599, 0.10625
        %v602 = vmul.f32 %v600, 0.10625
        %v603 = vmax.f32 %v601, 0.0
        %v604 = vmax.f32 %v602, 0.0
        %v605 = vmin.f32 %v603, 0.2125
        %v606 = vmin.f32 %v604, 0.2125
        %v607 = vld [vmem:[%s221] sm:$0xff]
        %v608 = vld [vmem:[%s221 + $0x8] sm:$0xff]
        %v609 = vsub.f32 %v231, %v229
        %v610 = vsub.f32 %v232, %v230
        %v611 = vand.u32 2147483647, %v609
        %v612 = vand.u32 2147483647, %v610
        %v613 = vmul.f32 %v611, 0.0375
        %v614 = vmul.f32 %v612, 0.0375
        %v615 = vadd.f32 %v605, %v613
        %v616 = vadd.f32 %v606, %v614
        %v617 = vadd.f32 %v607, %v615
        %v618 = vadd.f32 %v608, %v616
        %vm619 = vcmask 130048
        %620 = vst.msk [vmem:[%s221] sm:$0xff] %vm619, %v617
        %621 = vst.msk [vmem:[%s221 + $0x8] sm:$0xff] %vm619, %v618
        %s622 = sand.u32 %s98, 1
        %s623 = scalar_lea.sflag [#allocation4], %s622
        %s624 = sand.u32 %s98, 1
        %s625 = smul.addr %s624, 16
        %s626 = scalar_lea.vmem [#allocation7], %s625
        // Predicated region
        $region41: #{tpu_custom_call.1} parent=27 // pred_check
          %p627 = pneg %p108
        $region42: #{tpu_custom_call.1} parent=27 // pred_check_branch
          %629 = sbr.rel (%p627) target = $region44
        $region43: #{tpu_custom_call.1} parent=27 // pred_region
          %s631 = ssub.s32 256, 256
          %632 = vsyncadd %s623, %s631
          %s633 = smul.addr %s26, 2
          %s634 = smul.addr %s633, 128
          %s635 = scalar_lea.hbm %s2, %s634
          %s636 = sshll.u32 %s626, 4
          %s637 = int_to_ptr.vmem [resolvable:$true] %s636
          %642 = dma.vmem_to_hbm [thread:$0]  %s637, 256, %s635, %s623, 128, 128, 8
        $region44: #{tpu_custom_call.1} parent=27 // pred_fallthru
          _
      $region28: #{tpu_custom_call.1} parent=5 // pred_fallthru
        _
      %p643 = scmp.le.s32.totalorder 2, %s17
      // Predicated region
      $region45: #{tpu_custom_call.1} parent=5 // pred_check
        %p644 = pneg %p643
      $region46: #{tpu_custom_call.1} parent=5 // pred_check_branch
        %646 = sbr.rel (%p644) target = $region48
      $region47: #{tpu_custom_call.1} parent=5 // pred_region
        %s647 = ssub.s32 %s17, 2
        // Predicated region
        $region49: #{tpu_custom_call.1} parent=47 // pred_check
          %p648 = pneg %p114
        $region50: #{tpu_custom_call.1} parent=47 // pred_check_branch
          %650 = sbr.rel (%p648) target = $region52
        $region51: #{tpu_custom_call.1} parent=47 // pred_region
          %s651 = sand.u32 %s99, 1
          %s652 = scalar_lea.sflag [#allocation4], %s651
          %s653 = sand.u32 %s99, 1
          %s654 = smul.addr %s653, 16
          %s655 = scalar_lea.vmem [#allocation7], %s654
          %656 = dma.done %s652, 256
        $region52: #{tpu_custom_call.1} parent=47 // pred_fallthru
          _
      $region48: #{tpu_custom_call.1} parent=5 // pred_fallthru
        _
    $region6: #{tpu_custom_call.1} parent=1 // loop_footer
      %s21 = sadd.s32 1, %s17
    $region7: #{tpu_custom_call.1} parent=1 // loop_footer_branch
      %16 = sbr.rel target = $region3
    $region8: #{tpu_custom_call.1} parent=1 // loop_exit
      _
    %657 = vsyncpa [#allocation3], 1
    %s658 = scalar_lea.sflag [#allocation3], 1
    %659 = vsyncpa %s658, 1
    %660 = vsyncpa [#allocation6], 1
    %s661 = scalar_lea.sflag [#allocation6], 1
    %662 = vsyncpa %s661, 1
    %663 = vsyncpa [#allocation4], 1
    %s664 = scalar_lea.sflag [#allocation4], 1
    %665 = vsyncpa %s664, 1

</llo_original>
